<compile_context>
chip_gen: v7x
topology: tpu7x:2x2x1
jax: 0.10.0
libtpu: 0.0.40
codegen_flags: <defaults>
</compile_context>

<pallas_src>
import jax
import jax.numpy as jnp
from jax.experimental import pallas as pl
from jax.experimental.pallas import tpu as pltpu


def _round_up(x, m):
    return ((x + m - 1) // m) * m


def _sublane_multiple(dtype):
    # Minimum second-to-last (sublane) tile multiple is dtype dependent:
    # f32 -> 8, bf16 -> 16, int8/fp8 -> 32.
    bits = jnp.dtype(dtype).itemsize * 8
    return max(8, 256 // bits)


def _lane_unit(size):
    # Prefer 256-aligned N/K tiles (v6e/v7x MXU is 2x256^2) when the
    # 128-padded extent is already 256-aligned; otherwise 128 (fine for v5e).
    padded = _round_up(size, 128)
    return 256 if padded % 256 == 0 else 128


def _pick_tile(size, unit, cap):
    """Largest multiple of `unit` <= cap dividing round_up(size, unit).

    Dividing the padded extent exactly avoids phantom rows/cols (wasted MXU
    flops and HBM writeback) from rounding the problem up to a full tile.
    """
    padded = _round_up(size, unit)
    if padded <= cap:
        return padded
    t = (cap // unit) * unit
    while t > unit:
        if padded % t == 0:
            return t
        t -= unit
    return unit


def _vmem_bytes(tm, tn, tk, in_bytes, out_bytes):
    # Double-buffered x / W / bias / out blocks + resident f32 accumulator.
    return (2 * tm * tk * in_bytes          # x tiles
            + 2 * tk * tn * in_bytes        # W_t tiles
            + 2 * 8 * tn * 4                # bias tiles (sublane-padded)
            + 2 * tm * tn * out_bytes       # output tiles
            + tm * tn * 4)                  # f32 accumulator


def _linear_kernel(x_ref, w_ref, b_ref, o_ref, acc_ref):
    # Grid = (j over C tiles, i over B tiles, k over D reduction tiles).
    k = pl.program_id(2)

    @pl.when(k == 0)
    def _():
        # Fold the bias into the accumulator init: same cost as a zero fill,
        # removes one (tm, tn) VPU add + an extra acc pass from the epilogue.
        acc_ref[...] = jnp.broadcast_to(
            b_ref[...].astype(jnp.float32), acc_ref.shape
        )

    # MXU matmul with f32 accumulation.
    acc_ref[...] += jnp.dot(
        x_ref[...], w_ref[...], preferred_element_type=jnp.float32
    )

    @pl.when(k == pl.num_programs(2) - 1)
    def _():
        o_ref[...] = acc_ref[...].astype(o_ref.dtype)


def make_output_layer(weight, bias, *, tm_cap=512, tn_cap=1024, tk_cap=1024):
    """Builds `apply(x) = x @ weight.T + bias` (PyTorch nn.Linear forward).

    weight: (C, D) in PyTorch layout; bias: (C,).
    Weight transpose + padding is done ONCE here (hoisted out of the hot
    path); per-call work is the pallas_call plus a tiny x pad/slice when B or
    D are not already tile-aligned.
    """
    C, D = weight.shape
    assert bias.shape == (C,), (bias.shape, C)

    unit_n = _lane_unit(C)
    unit_k = _lane_unit(D)
    tn0 = _pick_tile(C, unit_n, tn_cap)
    tk0 = _pick_tile(D, unit_k, tk_cap)
    Cp = _round_up(C, tn0)
    Dp = _round_up(D, tk0)

    # Pre-padded, pre-transposed weight (Dp, Cp) and bias (1, Cp).  Zero
    # padding is exact: padded D rows multiply padded-zero x columns, padded
    # C columns are sliced off, padded bias entries are 0.
    w_t = jnp.pad(weight.T, ((0, Dp - D), (0, Cp - C)))
    b2 = jnp.pad(bias, (0, Cp - C)).reshape(1, Cp)

    # Per-generation VMEM budget: v7x has 64 MiB physical VMEM per TC,
    # v5e/v6e have 128 MiB.  Leave headroom for compiler internal scratch.
    try:
        vmem_cap = pltpu.get_tpu_info().vmem_capacity_bytes
    except Exception:
        vmem_cap = 64 * 1024 * 1024  # conservative (v7x-sized) fallback
    vmem_limit = max(32 * 1024 * 1024,
                     min(int(0.75 * vmem_cap), 96 * 1024 * 1024))

    @jax.jit
    def apply(x):
        B, Dx = x.shape
        assert Dx == D, (Dx, D)
        in_bytes = jnp.dtype(x.dtype).itemsize
        sub = _sublane_multiple(x.dtype)

        # Make the batch tile cover the whole (padded) batch whenever it
        # fits: the i grid extent becomes 1 and each W_t column block is
        # DMA'd from HBM exactly once.
        tm = _pick_tile(B, sub, max(tm_cap, sub))
        tn, tk = tn0, tk0

        # Shrink tiles (reduction/K first) if the double-buffered footprint
        # would exceed ~70% of this generation's VMEM budget.
        budget = int(0.7 * vmem_limit)
        while (_vmem_bytes(tm, tn, tk, in_bytes, in_bytes) > budget
               and (tk > 128 or tn > 128 or tm > sub)):
            if tk >= tn and tk > 128:
                tk = _pick_tile(D, 128, max(128, tk // 2))
            elif tn > 128:
                tn = _pick_tile(C, 128, max(128, tn // 2))
            else:
                tm = _pick_tile(B, sub, max(sub, tm // 2))

        Bp = _round_up(B, tm)

        xp = x
        if Bp != B or Dp != D:
            xp = jnp.pad(x, ((0, Bp - B), (0, Dp - D)))

        grid = (Cp // tn, Bp // tm, Dp // tk)  # (j, i, k); j outermost.

        out = pl.pallas_call(
            _linear_kernel,
            out_shape=jax.ShapeDtypeStruct((Bp, Cp), x.dtype),
            grid_spec=pltpu.PrefetchScalarGridSpec(
                num_scalar_prefetch=0,
                grid=grid,
                in_specs=[
                    pl.BlockSpec((tm, tk), lambda j, i, k: (i, k)),  # x
                    pl.BlockSpec((tk, tn), lambda j, i, k: (k, j)),  # W_t
                    pl.BlockSpec((1, tn), lambda j, i, k: (0, j)),   # bias
                ],
                out_specs=pl.BlockSpec((tm, tn), lambda j, i, k: (i, j)),
                scratch_shapes=[pltpu.VMEM((tm, tn), jnp.float32)],
            ),
            compiler_params=pltpu.CompilerParams(
                dimension_semantics=("parallel", "parallel", "arbitrary"),
                vmem_limit_bytes=vmem_limit,
            ),
        )(xp, w_t, b2)

        if Bp != B or Cp != C:
            out = out[:B, :C]
        return out

    return apply


if __name__ == "__main__":
    # Small shapes implied by the module: batch=8, input_dim=32, num_classes=16.
    batch, input_dim, num_classes = 8, 32, 16

    key = jax.random.PRNGKey(0)
    kx, kw, kb = jax.random.split(key, 3)

    x = jax.random.normal(kx, (batch, input_dim), dtype=jnp.float32)
    # PyTorch Linear stores weight as (C, D).
    bound = 1.0 / jnp.sqrt(input_dim)
    weight = jax.random.uniform(
        kw, (num_classes, input_dim), minval=-bound, maxval=bound,
        dtype=jnp.float32,
    )
    bias = jax.random.uniform(
        kb, (num_classes,), minval=-bound, maxval=bound, dtype=jnp.float32
    )

    layer = make_output_layer(weight, bias)
    y = layer(x)
    jax.block_until_ready(y)

    # Reference check (same semantics as PyTorch Linear forward).
    y_ref = x @ weight.T + bias
    assert y.shape == (batch, num_classes)
    assert jnp.allclose(y, y_ref, atol=1e-5, rtol=1e-5)

    print("KERNEL_OK")
</pallas_src>

<mosaic_0001>
module attributes {stable_mosaic.version = 11 : i64} {
  func.func @_linear_kernel(%arg0: i32, %arg1: i32, %arg2: i32, %arg3: memref<8x128xf32, #tpu.memory_space<vmem>>, %arg4: memref<128x128xf32, #tpu.memory_space<vmem>>, %arg5: memref<1x128xf32, #tpu.memory_space<vmem>>, %arg6: memref<8x128xf32, #tpu.memory_space<vmem>>, %arg7: memref<8x128xf32, #tpu.memory_space<vmem>>) attributes {dimension_semantics = [#tpu.dimension_semantics<parallel>, #tpu.dimension_semantics<parallel>, #tpu.dimension_semantics<arbitrary>], iteration_bounds = array<i64: 1, 1, 1>, scalar_prefetch = 0 : i64, scratch_operands = 1 : i64, tpu.core_type = #tpu.core_type<tc>, window_params = [{transform_indices = @transform_0, window_bounds = array<i64: 8, 128>}, {transform_indices = @transform_1, window_bounds = array<i64: 128, 128>}, {transform_indices = @transform_2, window_bounds = array<i64: 1, 128>}, {transform_indices = @transform_3, window_bounds = array<i64: 8, 128>}]} {
    %c0_i32 = arith.constant 0 : i32
    %0 = arith.cmpi eq, %arg2, %c0_i32 : i32
    %1 = arith.extui %0 : i1 to i32
    %c0_i32_0 = arith.constant 0 : i32
    %2 = arith.cmpi ne, %1, %c0_i32_0 : i32
    scf.if %2 {
      %c0_10 = arith.constant 0 : index
      %c0_11 = arith.constant 0 : index
      %12 = vector.load %arg5[%c0_10, %c0_11] : memref<1x128xf32, #tpu.memory_space<vmem>>, vector<1x128xf32>
      %13 = vector.shape_cast %12 : vector<1x128xf32> to vector<1x128xf32>
      %14 = vector.broadcast %13 : vector<1x128xf32> to vector<8x128xf32>
      %c0_12 = arith.constant 0 : index
      %c0_13 = arith.constant 0 : index
      %15 = vector.load %arg7[%c0_12, %c0_13] : memref<8x128xf32, #tpu.memory_space<vmem>>, vector<8x128xf32>
      tpu.vector_store %arg7[%c0_12, %c0_13], %14 {strides = array<i32>} : memref<8x128xf32, #tpu.memory_space<vmem>>, vector<8x128xf32>,
    } else {
    }
    %c0 = arith.constant 0 : index
    %c0_1 = arith.constant 0 : index
    %3 = vector.load %arg7[%c0, %c0_1] : memref<8x128xf32, #tpu.memory_space<vmem>>, vector<8x128xf32>
    %c0_2 = arith.constant 0 : index
    %c0_3 = arith.constant 0 : index
    %4 = vector.load %arg3[%c0_2, %c0_3] : memref<8x128xf32, #tpu.memory_space<vmem>>, vector<8x128xf32>
    %c0_4 = arith.constant 0 : index
    %c0_5 = arith.constant 0 : index
    %5 = vector.load %arg4[%c0_4, %c0_5] : memref<128x128xf32, #tpu.memory_space<vmem>>, vector<128x128xf32>
    %cst = arith.constant dense<0.000000e+00> : vector<8x128xf32>
    %6 = tpu.matmul %4, %5, %cst {dimension_numbers = #tpu.dot_dimension_numbers<[1], [0], [0], [1], [0, 0, 1, 1], [], []>} : vector<8x128xf32>, vector<128x128xf32>, vector<8x128xf32> -> vector<8x128xf32>
    %7 = arith.addf %3, %6 : vector<8x128xf32>
    %c0_6 = arith.constant 0 : index
    %c0_7 = arith.constant 0 : index
    %8 = vector.load %arg7[%c0_6, %c0_7] : memref<8x128xf32, #tpu.memory_space<vmem>>, vector<8x128xf32>
    tpu.vector_store %arg7[%c0_6, %c0_7], %7 {strides = array<i32>} : memref<8x128xf32, #tpu.memory_space<vmem>>, vector<8x128xf32>,
    %c0_i32_8 = arith.constant 0 : i32
    %9 = arith.cmpi eq, %arg2, %c0_i32_8 : i32
    %10 = arith.extui %9 : i1 to i32
    %c0_i32_9 = arith.constant 0 : i32
    %11 = arith.cmpi ne, %10, %c0_i32_9 : i32
    scf.if %11 {
      %c0_10 = arith.constant 0 : index
      %c0_11 = arith.constant 0 : index
      %12 = vector.load %arg7[%c0_10, %c0_11] : memref<8x128xf32, #tpu.memory_space<vmem>>, vector<8x128xf32>
      %c0_12 = arith.constant 0 : index
      %c0_13 = arith.constant 0 : index
      %13 = vector.load %arg6[%c0_12, %c0_13] : memref<8x128xf32, #tpu.memory_space<vmem>>, vector<8x128xf32>
      tpu.vector_store %arg6[%c0_12, %c0_13], %12 {strides = array<i32>} : memref<8x128xf32, #tpu.memory_space<vmem>>, vector<8x128xf32>,
    } else {
    }
    return
  }
  func.func @transform_0(%arg0: i32, %arg1: i32, %arg2: i32) -> (i32, i32) {
    %c0_i32 = arith.constant 0 : i32
    return %arg1, %arg2 : i32, i32
  }
  func.func @transform_1(%arg0: i32, %arg1: i32, %arg2: i32) -> (i32, i32) {
    %c0_i32 = arith.constant 0 : i32
    return %arg2, %arg0 : i32, i32
  }
  func.func @transform_2(%arg0: i32, %arg1: i32, %arg2: i32) -> (i32, i32) {
    %c0_i32 = arith.constant 0 : i32
    %c0_i32_0 = arith.constant 0 : i32
    return %c0_i32, %arg0 : i32, i32
  }
  func.func @transform_3(%arg0: i32, %arg1: i32, %arg2: i32) -> (i32, i32) {
    %c0_i32 = arith.constant 0 : i32
    return %arg1, %arg0 : i32, i32
  }
}

</mosaic_0001>

<llo_original>
// kernel: apply.1
$region0: #{apply.1}
  #allocation0 [shape = 'u32[]', space=smem, size = 0x4, offset = 0x4, fixed_abs, tag = 'smem constant byte address 0x4 - core index']
  #allocation1 [shape = 'u32[144,128]{1,0:T(1,128)}', space=vmem, size = 0x12000, scoped, tag = 'internal scratch']
  #allocation2 [shape = 'f32[8,128]{1,0:T(8,128)}', space=vmem, size = 0x1000, scoped, tag = 'scratch operand']
  %s0 = inlined_call_operand.vmem [shape: f32[8,128], index: 0, kind: input, shape index: {}]
  %s1 = inlined_call_operand.hbm [shape: f32[128,128], index: 1, kind: input, shape index: {}]
  %s2 = inlined_call_operand.vmem [shape: f32[1,128], index: 2, kind: input, shape index: {}]
  %s3 = inlined_call_operand.hbm [shape: f32[8,128], index: 3, kind: output, shape index: {}]
  %s4 = sld [smem:[#allocation0]]
  $region34: #{apply.1} parent=0
    _
  %s6 = ssub.s32 1, %s4
  %s7 = scalar_select 0, %s6, %s4
  $region1: #{apply.1} parent=0
    #allocation3 [shape = 'u8[65536]{0}', space=vmem, size = 0x10000, scoped, tag = 'input window, operand 1, single buffered']
    #allocation4 [shape = 's32[1]{0}', space=sflag, size = 0x4, scoped, tag = 'scoped memory for apply.1']
    #allocation5 [shape = 's32[1]{0}', space=sflag, size = 0x4, scoped, tag = 'scoped memory for apply.1']
    #allocation6 [shape = 'u8[4096]{0}', space=vmem, size = 0x1000, scoped, tag = 'output window, operand 0, single buffered']
    %8 = vsyncpa [#allocation4], 0
    %9 = vsyncpa [#allocation5], 0
    // Predicated region
    $region2: #{apply.1} parent=1 // pred_check
      _
    $region3: #{apply.1} parent=1 // pred_check_branch
      %11 = sbr.rel (0) target = $region5
    $region4: #{apply.1} parent=1 // pred_region
      _
    $region5: #{apply.1} parent=1 // pred_fallthru
      _
    // Predicated region
    $region6: #{apply.1} parent=1 // pred_check
      _
    $region7: #{apply.1} parent=1 // pred_check_branch
      %13 = sbr.rel (0) target = $region9
    $region8: #{apply.1} parent=1 // pred_region
      %s15 = ssub.s32 2048, 2048
      %16 = vsyncadd [#allocation4], %s15
      %s17 = sshll.u32 [#allocation3], 4
      %s18 = int_to_ptr.vmem [resolvable:$true] %s17
      %23 = dma.hbm_to_vmem [thread:$0]  %s1, 2048, %s18, [#allocation4], 128, 128, 8
    $region9: #{apply.1} parent=1 // pred_fallthru
      _
    // Predicated region
    $region10: #{apply.1} parent=1 // pred_check
      _
    $region11: #{apply.1} parent=1 // pred_check_branch
      %25 = sbr.rel (0) target = $region13
    $region12: #{apply.1} parent=1 // pred_region
      _
    $region13: #{apply.1} parent=1 // pred_fallthru
      _
    // Predicated region
    $region14: #{apply.1} parent=1 // pred_check
      _
    $region15: #{apply.1} parent=1 // pred_check_branch
      %27 = sbr.rel (0) target = $region17
    $region16: #{apply.1} parent=1 // pred_region
      %28 = dma.done [#allocation4], 2048
    $region17: #{apply.1} parent=1 // pred_fallthru
      _
    %p29 = scmp.eq.s32.totalorder 0, 0
    // Predicated region
    $region18: #{apply.1} parent=1 // pred_check
      %p30 = pneg %p29
    $region19: #{apply.1} parent=1 // pred_check_branch
      %32 = sbr.rel (%p30) target = $region21
    $region20: #{apply.1} parent=1 // pred_region
      %v33 = vld [vmem:[%s2] sm:$0x1]
      %v35 = vlaneseq
      %v36 = vshrl.u32 %v35, 7
      %v37 = vsub.s32 0, %v36
      %v38 = vrot.slane %v33, %v37
      %40 = vst [vmem:[#allocation2] sm:$0xff] %v38
    $region21: #{apply.1} parent=1 // pred_fallthru
      _
    %v41 = vld [vmem:[#allocation2] sm:$0xff]
    %v42 = vld [vmem:[%s0] sm:$0xff]
    %v43 = vld [vmem:[#allocation3] sm:$0xff]
    %v44 = vld [vmem:[#allocation3 + $0x8] sm:$0xff]
    %v45 = vld [vmem:[#allocation3 + $0x10] sm:$0xff]
    %v46 = vld [vmem:[#allocation3 + $0x18] sm:$0xff]
    %v47 = vld [vmem:[#allocation3 + $0x20] sm:$0xff]
    %v48 = vld [vmem:[#allocation3 + $0x28] sm:$0xff]
    %v49 = vld [vmem:[#allocation3 + $0x30] sm:$0xff]
    %v50 = vld [vmem:[#allocation3 + $0x38] sm:$0xff]
    %v51 = vld [vmem:[#allocation3 + $0x40] sm:$0xff]
    %v52 = vld [vmem:[#allocation3 + $0x48] sm:$0xff]
    %v53 = vld [vmem:[#allocation3 + $0x50] sm:$0xff]
    %v54 = vld [vmem:[#allocation3 + $0x58] sm:$0xff]
    %v55 = vld [vmem:[#allocation3 + $0x60] sm:$0xff]
    %v56 = vld [vmem:[#allocation3 + $0x68] sm:$0xff]
    %v57 = vld [vmem:[#allocation3 + $0x70] sm:$0xff]
    %v58 = vld [vmem:[#allocation3 + $0x78] sm:$0xff]
    %59 = vmatprep.subr.mxu0 0.0
    %60 = vmatpush1.msra.mxu0 %v43
    %61 = vmatprep.subr.mxu0 0.0
    %62 = vmatpush1.msra.mxu0 %v44
    %63 = vmatprep.subr.mxu0 0.0
    %64 = vmatpush1.msra.mxu0 %v45
    %65 = vmatprep.subr.mxu0 0.0
    %66 = vmatpush1.msra.mxu0 %v46
    %67 = vmatprep.subr.mxu0 0.0
    %68 = vmatpush1.msra.mxu0 %v47
    %69 = vmatprep.subr.mxu0 0.0
    %70 = vmatpush1.msra.mxu0 %v48
    %71 = vmatprep.subr.mxu0 0.0
    %72 = vmatpush1.msra.mxu0 %v49
    %73 = vmatprep.subr.mxu0 0.0
    %74 = vmatpush1.msra.mxu0 %v50
    %75 = vmatprep.subr.mxu0 0.0
    %76 = vmatpush1.msra.mxu0 %v51
    %77 = vmatprep.subr.mxu0 0.0
    %78 = vmatpush1.msra.mxu0 %v52
    %79 = vmatprep.subr.mxu0 0.0
    %80 = vmatpush1.msra.mxu0 %v53
    %81 = vmatprep.subr.mxu0 0.0
    %82 = vmatpush1.msra.mxu0 %v54
    %83 = vmatprep.subr.mxu0 0.0
    %84 = vmatpush1.msra.mxu0 %v55
    %85 = vmatprep.subr.mxu0 0.0
    %86 = vmatpush1.msra.mxu0 %v56
    %87 = vmatprep.subr.mxu0 0.0
    %88 = vmatpush1.msra.mxu0 %v57
    %89 = vmatprep.subr.mxu0 0.0
    %90 = vmatpush1.msra.mxu0 %v58
    %91 = vmatprep.subr.mxu0 0.0
    %92 = vmatpush1.msra.mxu0 0.0
    %93 = vmatprep.subr.mxu0 0.0
    %94 = vmatpush1.msra.mxu0 0.0
    %95 = vmatprep.subr.mxu0 0.0
    %96 = vmatpush1.msra.mxu0 0.0
    %97 = vmatprep.subr.mxu0 0.0
    %98 = vmatpush1.msra.mxu0 0.0
    %99 = vmatprep.subr.mxu0 0.0
    %100 = vmatpush1.msra.mxu0 0.0
    %101 = vmatprep.subr.mxu0 0.0
    %102 = vmatpush1.msra.mxu0 0.0
    %103 = vmatprep.subr.mxu0 0.0
    %104 = vmatpush1.msra.mxu0 0.0
    %105 = vmatprep.subr.mxu0 0.0
    %106 = vmatpush1.msra.mxu0 0.0
    %107 = vmatprep.subr.mxu0 0.0
    %108 = vmatpush1.msra.mxu0 0.0
    %109 = vmatprep.subr.mxu0 0.0
    %110 = vmatpush1.msra.mxu0 0.0
    %111 = vmatprep.subr.mxu0 0.0
    %112 = vmatpush1.msra.mxu0 0.0
    %113 = vmatprep.subr.mxu0 0.0
    %114 = vmatpush1.msra.mxu0 0.0
    %115 = vmatprep.subr.mxu0 0.0
    %116 = vmatpush1.msra.mxu0 0.0
    %117 = vmatprep.subr.mxu0 0.0
    %118 = vmatpush1.msra.mxu0 0.0
    %119 = vmatprep.subr.mxu0 0.0
    %120 = vmatpush1.msra.mxu0 0.0
    %121 = vmatprep.subr.mxu0 0.0
    %122 = vmatpush1.msra.mxu0 0.0
    %123 = vmatprep.mubr.f32.mxu0 0.0
    %124 = vmatmul.mubr.f32.gmra.mrb[0].mxu0 %v42
    %v125 = vpop.f32.mrb[0].mxu0
    %v126 = vadd.f32 0.0, %v125
    %v127 = vpop.f32.mrb[0].mxu0
    %128 = vdwg.mxu0
    %v129 = vadd.f32 %v41, %v126
    %130 = vst [vmem:[#allocation2] sm:$0xff] %v129
    // Predicated region
    $region22: #{apply.1} parent=1 // pred_check
      %p131 = pneg %p29
    $region23: #{apply.1} parent=1 // pred_check_branch
      %133 = sbr.rel (%p131) target = $region25
    $region24: #{apply.1} parent=1 // pred_region
      %v134 = vld [vmem:[#allocation2] sm:$0xff]
      %135 = vst [vmem:[#allocation6] sm:$0xff] %v134
    $region25: #{apply.1} parent=1 // pred_fallthru
      _
    // Predicated region
    $region26: #{apply.1} parent=1 // pred_check
      _
    $region27: #{apply.1} parent=1 // pred_check_branch
      %137 = sbr.rel (0) target = $region29
    $region28: #{apply.1} parent=1 // pred_region
      %s139 = ssub.s32 128, 128
      %140 = vsyncadd [#allocation5], %s139
      %s142 = sshll.u32 [#allocation6], 4
      %s143 = int_to_ptr.vmem [resolvable:$true] %s142
      %145 = dma.vmem_to_hbm [thread:$0]  %s143, 128, %s3, [#allocation5]
    $region29: #{apply.1} parent=1 // pred_fallthru
      _
    // Predicated region
    $region30: #{apply.1} parent=1 // pred_check
      _
    $region31: #{apply.1} parent=1 // pred_check_branch
      %147 = sbr.rel (0) target = $region33
    $region32: #{apply.1} parent=1 // pred_region
      %148 = dma.done [#allocation5], 128
    $region33: #{apply.1} parent=1 // pred_fallthru
      _
    %149 = vsyncpa [#allocation4], 1
    %150 = vsyncpa [#allocation5], 1

</llo_original>
